<compile_context>
chip_gen: v5e
topology: v5e:2x2
jax: 0.10.0
libtpu: 0.0.40
codegen_flags: <defaults>
</compile_context>

<pallas_src>
import functools
import math

import jax
import jax.numpy as jnp
from jax.experimental import pallas as pl
from jax.experimental.pallas import tpu as pltpu


_MAX_TN = 8192          # bounds the unrolled lane-group reduce & per-buffer DMA
_DEBUG_MAX_TN = None    # test hook: force tiny column tiles


def _round_up(x, m):
    return ((x + m - 1) // m) * m


@functools.lru_cache(maxsize=None)
def _vmem_budget():
    """Generation-aware VMEM sizing -> (stream budget bytes, vmem_limit_bytes)."""
    phys = 64 * 1024 * 1024                      # conservative fallback (v7x per-TC)
    try:
        phys = int(pltpu.get_tpu_info().vmem_capacity_bytes)
    except Exception:
        pass
    # v5e/v6e (128 MiB physical) -> 64 MiB scoped limit, 32 MiB stream budget;
    # v7x (64 MiB per TensorCore)  -> 32 MiB limit, 16 MiB budget.
    limit = min(max(phys // 2, 32 * 1024 * 1024), 96 * 1024 * 1024)
    return limit // 2, limit


def _plan(rows, d, stream_dtypes):
    """Pick the column tile width tn, #parallel splits and tiles-per-split."""
    budget, limit = _vmem_budget()
    # Per-lane-column VMEM bytes of all double-buffered input streams, with the
    # sublane padding appropriate to each dtype's packing (f32:8, bf16:16, i8:32).
    col_bytes = 0
    for dt in stream_dtypes:
        es = jnp.dtype(dt).itemsize
        sub = 8 * max(4 // es, 1)
        col_bytes += 2 * _round_up(rows, sub) * es
    tn = max(128, (budget // max(col_bytes, 1)) // 128 * 128)
    tn = min(tn, _MAX_TN)
    if _DEBUG_MAX_TN is not None:
        tn = min(tn, _DEBUG_MAX_TN)
    if tn >= d:
        tn = d
        num_tiles = 1
    else:
        # Balance tiles so the ragged tail tile is not mostly out-of-bounds DMA.
        num_tiles = pl.cdiv(d, tn)
        tn = _round_up(pl.cdiv(d, num_tiles), 128)
        num_tiles = pl.cdiv(d, tn)
    # 2-way "parallel" split of the reduction stream (megacore sharding on
    # multi-TensorCore chips; sequential and harmless on single-TC v5e/v6e).
    nsplit = 2 if (num_tiles >= 2 and num_tiles % 2 == 0) else 1
    tps = num_tiles // nsplit
    return tn, nsplit, tps, limit


def _n_sums(has_mask, feat_norm):
    if feat_norm:
        return 6 if has_mask else 3
    return 2 if has_mask else 1


def _fold_factor(n, d):
    """Fold part of D into the row axis so small batches fill the 8 sublanes."""
    k = 8 // math.gcd(n, 8)
    while k > 1 and d % k != 0:
        k //= 2
    return k


# ----------------------------------------------------------------------------
# Single streaming kernel: per-row reduction columns for one stage.
#   feat_norm & mask : [Σs², Σt², Σm·s·t, Σm·s², Σm·t², Σm]
#   feat_norm        : [Σs², Σt², Σs·t]
#   mask             : [Σm·(s-t)², Σm]
#   plain            : [Σ(s-t)²]
# ----------------------------------------------------------------------------
def _make_stage_kernel(rows, d, tn, tps, has_mask, feat_norm):
    aw = 128 if tn % 128 == 0 else 1             # per-quantity accumulator width
    ngroups = tn // 128 if aw == 128 else 1
    tail = (aw == 128) and (d % tn != 0)
    num_tiles = pl.cdiv(d, tn)
    nsums = _n_sums(has_mask, feat_norm)

    def _lane_partial(x):
        # (rows, tn) -> (rows, aw): for 128-aligned tiles this is a chain of
        # lane-aligned 128-wide VPU adds (no cross-lane XLU in the hot loop,
        # no wide accumulator RMW). The tiny single-tile non-128-multiple case
        # falls back to one cross-lane reduce.
        if aw == 1:
            return jnp.sum(x, axis=-1, keepdims=True)
        acc = x[:, 0:128]
        for g in range(1, ngroups):
            acc = acc + x[:, g * 128:(g + 1) * 128]
        return acc

    def kernel(*refs):
        if has_mask:
            s_ref, t_ref, m_ref, out_ref = refs
        else:
            s_ref, t_ref, out_ref = refs
            m_ref = None
        p = pl.program_id(0)
        j = pl.program_id(1)

        @pl.when(j == 0)
        def _():
            out_ref[...] = jnp.zeros_like(out_ref)

        def accumulate(apply_tail):
            s = s_ref[...].astype(jnp.float32)
            t = t_ref[...].astype(jnp.float32)
            m = m_ref[...].astype(jnp.float32) if has_mask else None
            if apply_tail:
                # Zero the out-of-bounds lanes of the single ragged tail tile so
                # OOB garbage (possibly NaN) never reaches a product.
                col0 = (p * tps + j) * tn
                lane = jax.lax.broadcasted_iota(jnp.int32, s.shape, 1)
                valid = (lane + col0) < d
                s = jnp.where(valid, s, 0.0)
                t = jnp.where(valid, t, 0.0)
                if has_mask:
                    m = jnp.where(valid, m, 0.0)
            parts = []
            if feat_norm:
                ss = s * s
                tt = t * t
                parts.append(_lane_partial(ss))               # Σ s²
                parts.append(_lane_partial(tt))               # Σ t²
                if has_mask:
                    parts.append(_lane_partial(m * (s * t)))  # Σ m·s·t
                    parts.append(_lane_partial(m * ss))       # Σ m·s²
                    parts.append(_lane_partial(m * tt))       # Σ m·t²
                    parts.append(_lane_partial(m))            # Σ m
                else:
                    parts.append(_lane_partial(s * t))        # Σ s·t
            else:
                diff = s - t
                sq = diff * diff
                if has_mask:
                    parts.append(_lane_partial(sq * m))       # Σ m·(s-t)²
                    parts.append(_lane_partial(m))            # Σ m
                else:
                    parts.append(_lane_partial(sq))           # Σ (s-t)²
            upd = parts[0] if len(parts) == 1 else jnp.concatenate(parts, axis=-1)
            out_ref[...] += upd

        if tail:
            # Tail masking only runs on the last tile; all other tiles take the
            # lean unmasked path.
            idx = p * tps + j

            @pl.when(idx != num_tiles - 1)
            def _():
                accumulate(False)

            @pl.when(idx == num_tiles - 1)
            def _():
                accumulate(True)
        else:
            accumulate(False)

    return kernel, nsums, aw


@functools.lru_cache(maxsize=None)
def _build_stage_call(rows, d, tn, nsplit, tps, has_mask, feat_norm, vmem_limit):
    kernel, nsums, aw = _make_stage_kernel(rows, d, tn, tps, has_mask, feat_norm)
    stream = pl.BlockSpec((rows, tn), lambda p, j: (0, p * tps + j))
    in_specs = [stream, stream] + ([stream] if has_mask else [])
    out_spec = pl.BlockSpec((None, rows, nsums * aw), lambda p, j: (p, 0, 0))
    call = pl.pallas_call(
        kernel,
        out_shape=jax.ShapeDtypeStruct((nsplit, rows, nsums * aw), jnp.float32),
        grid_spec=pltpu.PrefetchScalarGridSpec(
            num_scalar_prefetch=0,
            grid=(nsplit, tps),
            in_specs=in_specs,
            out_specs=out_spec),
        compiler_params=pltpu.CompilerParams(
            dimension_semantics=("parallel", "arbitrary"),
            vmem_limit_bytes=vmem_limit),
    )
    return call, nsums, aw


def _stage_sums(s2, t2, m2, feat_norm):
    """One streaming pass over a stage -> per-row reduction columns (rows, n_sums)."""
    rows, d = s2.shape
    has_mask = m2 is not None
    dtypes = (str(s2.dtype), str(t2.dtype)) + ((str(m2.dtype),) if has_mask else ())
    tn, nsplit, tps, vmem_limit = _plan(rows, d, dtypes)
    call, nsums, aw = _build_stage_call(rows, d, tn, nsplit, tps, has_mask,
                                        feat_norm, vmem_limit)
    args = (s2, t2, m2) if has_mask else (s2, t2)
    parts = call(*args)                               # (nsplit, rows, nsums*aw)
    sums = jnp.sum(parts, axis=0)                     # (rows, nsums*aw)
    if aw > 1:
        sums = jnp.sum(sums.reshape(rows, nsums, aw), axis=-1)
    return sums                                       # (rows, nsums)


# ----------------------------------------------------------------------------
# Module-equivalent wrapper (no learnable parameters in L2Loss).
# ----------------------------------------------------------------------------
class L2Loss:
    def __init__(self, feat_norm=False, batch_mean=False, loss_weight=1.0):
        self.feat_norm = feat_norm
        self.batch_mean = batch_mean
        self.loss_weight = loss_weight

    def __call__(self, s_features, t_features, masks=None):
        assert isinstance(s_features, list) and isinstance(t_features, list), \
            'features must be list!'
        if masks is not None:
            assert isinstance(masks, list) and len(masks) == len(s_features), \
                'masks must be consistent with features!'
        else:
            # Mask-less fast path: never materialize / stream an all-ones mask.
            masks = [None] * len(s_features)

        total_loss = jnp.float32(0.0)
        for s, t, m in zip(s_features, t_features, masks):
            n = s.shape[0]
            d = 1
            for dim in s.shape[1:]:
                d *= dim
            k = _fold_factor(n, d)                # sublane-fill row folding
            rows, dk = n * k, d // k
            s2 = s.reshape(rows, dk)
            t2 = t.reshape(rows, dk)
            if m is not None:
                m2 = m.reshape(rows, dk)
                if m2.dtype == jnp.bool_:
                    m2 = m2.astype(jnp.int8)      # narrow stream; f32 cast in-kernel
            else:
                m2 = None

            sums = _stage_sums(s2, t2, m2, self.feat_norm)     # (rows, n_sums)

            if self.feat_norm:
                per = jnp.sum(sums.reshape(n, k, sums.shape[-1]), axis=1)  # (n, *)
                a = per[:, 0]                     # Σ s² per sample
                b = per[:, 1]                     # Σ t² per sample
                r = per[:, 2]                     # Σ [m·] s·t per sample
                # Σ m·(s/‖s‖ - t/‖t‖)² = Σm·s²/a + Σm·t²/b - 2·Σm·s·t/√(a·b)
                # Zero-norm rows give 0/0 = NaN, mirroring the reference's x/0.
                if m2 is not None:
                    loss = jnp.sum(per[:, 3] / a + per[:, 4] / b
                                   - 2.0 * r / jnp.sqrt(a * b))
                    msum = jnp.sum(per[:, 5])
                else:
                    loss = jnp.sum(2.0 - 2.0 * r / jnp.sqrt(a * b))
                    msum = None
            else:
                tot = jnp.sum(sums, axis=0)
                loss = tot[0]
                msum = tot[1] if m2 is not None else None

            if self.batch_mean:
                loss = loss / n
            elif m2 is None:
                loss = loss / float(n * d)        # sum(ones mask) = n*d != 0
            else:
                loss = jnp.where(msum != 0, loss / msum, loss)
            total_loss = total_loss + loss
        return total_loss * self.loss_weight


# ----------------------------------------------------------------------------
# Pure-JAX reference for sanity checking.
# ----------------------------------------------------------------------------
def _ref_l2_loss(s_features, t_features, masks=None, feat_norm=False,
                 batch_mean=False, loss_weight=1.0):
    total = jnp.float32(0.0)
    for i, (s, t) in enumerate(zip(s_features, t_features)):
        n = s.shape[0]
        s2 = s.reshape(n, -1).astype(jnp.float32)
        t2 = t.reshape(n, -1).astype(jnp.float32)
        if feat_norm:
            s2 = s2 / jnp.linalg.norm(s2, axis=1, keepdims=True)
            t2 = t2 / jnp.linalg.norm(t2, axis=1, keepdims=True)
        if masks is None:
            m2 = jnp.ones_like(s2)
        else:
            m2 = masks[i].reshape(n, -1).astype(jnp.float32)
        loss = jnp.sum((s2 - t2) ** 2 * m2)
        if batch_mean:
            loss = loss / n
        else:
            ms = jnp.sum(m2)
            loss = jnp.where(ms != 0, loss / ms, loss)
        total = total + loss
    return total * loss_weight


if __name__ == "__main__":
    key = jax.random.PRNGKey(0)
    ks = jax.random.split(key, 9)

    # Small NCHW feature maps (three distillation stages; the last has
    # D = 5*13*14 = 910, not a multiple of 128, to exercise tail handling).
    shapes = [(2, 4, 16, 16), (2, 8, 8, 8), (2, 5, 13, 14)]
    s_features = [jax.random.normal(ks[i], sh, jnp.float32)
                  for i, sh in enumerate(shapes)]
    t_features = [jax.random.normal(ks[3 + i], sh, jnp.float32)
                  for i, sh in enumerate(shapes)]
    masks_f = [(jax.random.uniform(ks[6 + i], sh) > 0.3).astype(jnp.bfloat16)
               for i, sh in enumerate(shapes)]
    masks_b = [(jax.random.uniform(ks[6 + i], sh) > 0.3)
               for i, sh in enumerate(shapes)]

    def _check(feat_norm, batch_mean, loss_weight, mk):
        out = L2Loss(feat_norm=feat_norm, batch_mean=batch_mean,
                     loss_weight=loss_weight)(s_features, t_features, mk)
        jax.block_until_ready(out)
        ref = _ref_l2_loss(s_features, t_features, mk, feat_norm=feat_norm,
                           batch_mean=batch_mean, loss_weight=loss_weight)
        # rtol relaxed to 1e-4: the fused feat_norm path uses the exact
        # algebraic expansion, whose f32 rounding differs slightly from the
        # reference's subtract-then-square order.
        assert jnp.allclose(out, ref, rtol=1e-4, atol=1e-5), \
            (feat_norm, batch_mean, loss_weight, out, ref)

    _check(False, False, 1.0, None)       # mask-less fast path
    _check(True, True, 2.0, None)         # feat_norm + batch_mean
    _check(False, False, 1.0, masks_f)    # float mask
    _check(True, False, 0.5, masks_f)     # feat_norm + float mask
    _check(False, False, 1.0, masks_b)    # boolean mask (int8 stream)

    # Force tiny column tiles so the multi-tile accumulator path, the gated
    # tail masking and the 2-way parallel split are exercised at these sizes.
    _DEBUG_MAX_TN = 128
    _check(False, False, 1.0, None)
    _check(True, False, 1.0, masks_f)
    _DEBUG_MAX_TN = None

    print("KERNEL_OK")
</pallas_src>

<mosaic_0001>
module attributes {stable_mosaic.version = 11 : i64} {
  func.func @kernel(%arg0: i32, %arg1: i32, %arg2: memref<8x256xf32, #tpu.memory_space<vmem>>, %arg3: memref<8x256xf32, #tpu.memory_space<vmem>>, %arg4: memref<1x8x128xf32, #tpu.memory_space<vmem>>) attributes {dimension_semantics = [#tpu.dimension_semantics<parallel>, #tpu.dimension_semantics<arbitrary>], iteration_bounds = array<i64: 1, 1>, scalar_prefetch = 0 : i64, scratch_operands = 0 : i64, tpu.core_type = #tpu.core_type<tc>, window_params = [{transform_indices = @transform_0, window_bounds = array<i64: 8, 256>}, {transform_indices = @transform_1, window_bounds = array<i64: 8, 256>}, {transform_indices = @transform_2, window_bounds = array<i64: 1, 8, 128>}]} {
    %c0_i32 = arith.constant 0 : i32
    %0 = arith.cmpi eq, %arg1, %c0_i32 : i32
    %1 = arith.extui %0 : i1 to i32
    %c0_i32_0 = arith.constant 0 : i32
    %2 = arith.cmpi ne, %1, %c0_i32_0 : i32
    scf.if %2 {
      %cst = arith.constant 0.000000e+00 : f32
      %16 = vector.broadcast %cst : f32 to vector<8x128xf32>
      %c0_10 = arith.constant 0 : index
      %c0_11 = arith.constant 0 : index
      %c0_12 = arith.constant 0 : index
      %17 = vector.load %arg4[%c0_10, %c0_11, %c0_12] : memref<1x8x128xf32, #tpu.memory_space<vmem>>, vector<1x8x128xf32>
      %18 = vector.shape_cast %17 : vector<1x8x128xf32> to vector<8x128xf32>
      %19 = vector.shape_cast %16 : vector<8x128xf32> to vector<1x8x128xf32>
      tpu.vector_store %arg4[%c0_10, %c0_11, %c0_12], %19 {strides = array<i32>} : memref<1x8x128xf32, #tpu.memory_space<vmem>>, vector<1x8x128xf32>,
    } else {
    }
    %c0 = arith.constant 0 : index
    %c0_1 = arith.constant 0 : index
    %3 = vector.load %arg2[%c0, %c0_1] : memref<8x256xf32, #tpu.memory_space<vmem>>, vector<8x256xf32>
    %c0_2 = arith.constant 0 : index
    %c0_3 = arith.constant 0 : index
    %4 = vector.load %arg3[%c0_2, %c0_3] : memref<8x256xf32, #tpu.memory_space<vmem>>, vector<8x256xf32>
    %5 = arith.subf %3, %4 : vector<8x256xf32>
    %6 = arith.mulf %5, %5 : vector<8x256xf32>
    %7 = vector.extract_strided_slice %6 {offsets = [0, 0], sizes = [8, 128], strides = [1, 1]} : vector<8x256xf32> to vector<8x128xf32>
    %8 = vector.extract_strided_slice %6 {offsets = [0, 128], sizes = [8, 128], strides = [1, 1]} : vector<8x256xf32> to vector<8x128xf32>
    %9 = arith.addf %7, %8 : vector<8x128xf32>
    %c0_4 = arith.constant 0 : index
    %c0_5 = arith.constant 0 : index
    %c0_6 = arith.constant 0 : index
    %10 = vector.load %arg4[%c0_4, %c0_5, %c0_6] : memref<1x8x128xf32, #tpu.memory_space<vmem>>, vector<1x8x128xf32>
    %11 = vector.shape_cast %10 : vector<1x8x128xf32> to vector<8x128xf32>
    %12 = arith.addf %11, %9 : vector<8x128xf32>
    %c0_7 = arith.constant 0 : index
    %c0_8 = arith.constant 0 : index
    %c0_9 = arith.constant 0 : index
    %13 = vector.load %arg4[%c0_7, %c0_8, %c0_9] : memref<1x8x128xf32, #tpu.memory_space<vmem>>, vector<1x8x128xf32>
    %14 = vector.shape_cast %13 : vector<1x8x128xf32> to vector<8x128xf32>
    %15 = vector.shape_cast %12 : vector<8x128xf32> to vector<1x8x128xf32>
    tpu.vector_store %arg4[%c0_7, %c0_8, %c0_9], %15 {strides = array<i32>} : memref<1x8x128xf32, #tpu.memory_space<vmem>>, vector<1x8x128xf32>,
    return
  }
  func.func @transform_0(%arg0: i32, %arg1: i32) -> (i32, i32) {
    %c1_i32 = arith.constant 1 : i32
    %0 = arith.muli %arg0, %c1_i32 : i32
    %1 = arith.addi %0, %arg1 : i32
    %c0_i32 = arith.constant 0 : i32
    %c0_i32_0 = arith.constant 0 : i32
    return %c0_i32, %1 : i32, i32
  }
  func.func @transform_1(%arg0: i32, %arg1: i32) -> (i32, i32) {
    %c1_i32 = arith.constant 1 : i32
    %0 = arith.muli %arg0, %c1_i32 : i32
    %1 = arith.addi %0, %arg1 : i32
    %c0_i32 = arith.constant 0 : i32
    %c0_i32_0 = arith.constant 0 : i32
    return %c0_i32, %1 : i32, i32
  }
  func.func @transform_2(%arg0: i32, %arg1: i32) -> (i32, i32, i32) {
    %c0_i32 = arith.constant 0 : i32
    %c0_i32_0 = arith.constant 0 : i32
    %c0_i32_1 = arith.constant 0 : i32
    return %arg0, %c0_i32, %c0_i32_0 : i32, i32, i32
  }
}

</mosaic_0001>

<llo_original>
// kernel: tpu_custom_call.1
$region0: #{tpu_custom_call.1}
  #allocation0 [shape = 'u32[]', space=smem, size = 0x4, offset = 0x4, fixed_abs, tag = 'smem constant byte address 0x4 - core index']
  #allocation1 [shape = 'u32[72,128]{1,0:T(1,128)}', space=vmem, size = 0x9000, scoped, tag = 'internal scratch']
  %s0 = inlined_call_operand.hbm [shape: f32[8,256], index: 0, kind: input, shape index: {}]
  %s1 = inlined_call_operand.hbm [shape: f32[8,256], index: 1, kind: input, shape index: {}]
  %s2 = inlined_call_operand.hbm [shape: f32[1,8,128], index: 2, kind: output, shape index: {}]
  %s3 = sld [smem:[#allocation0]]
  $region30: #{tpu_custom_call.1} parent=0
    _
  %s5 = ssub.s32 1, %s3
  %s6 = scalar_select 0, %s5, %s3
  $region1: #{tpu_custom_call.1} parent=0
    #allocation2 [shape = 'u8[8192]{0}', space=vmem, size = 0x2000, scoped, tag = 'input window, operand 0, single buffered']
    #allocation3 [shape = 's32[1]{0}', space=sflag, size = 0x4, scoped, tag = 'scoped memory for tpu_custom_call.1']
    #allocation4 [shape = 's32[1]{0}', space=sflag, size = 0x4, scoped, tag = 'scoped memory for tpu_custom_call.1']
    #allocation5 [shape = 'u8[8192]{0}', space=vmem, size = 0x2000, scoped, tag = 'input window, operand 1, single buffered']
    #allocation6 [shape = 's32[1]{0}', space=sflag, size = 0x4, scoped, tag = 'scoped memory for tpu_custom_call.1']
    #allocation7 [shape = 'u8[4096]{0}', space=vmem, size = 0x1000, scoped, tag = 'output window, operand 0, single buffered']
    %7 = vsyncpa [#allocation3], 0
    %8 = vsyncpa [#allocation6], 0
    %9 = vsyncpa [#allocation4], 0
    // Predicated region
    $region2: #{tpu_custom_call.1} parent=1 // pred_check
      _
    $region3: #{tpu_custom_call.1} parent=1 // pred_check_branch
      %11 = sbr.rel (0) target = $region5
    $region4: #{tpu_custom_call.1} parent=1 // pred_region
      %s12 = sadd.s32 0, 0
      %s13 = smul.u32 2, %s12
      %15 = vsyncadd [#allocation3], 0
      %s16 = smul.addr %s13, 8
      %s17 = scalar_lea.hbm %s0, %s16
      %s19 = sshll.u32 %s17, 4
      %s20 = int_to_ptr.hbm [resolvable:$true] %s19
      %s21 = sshll.u32 [#allocation2], 4
      %s22 = int_to_ptr.vmem [resolvable:$true] %s21
      %24 = dma.hbm_to_vmem [thread:$0]  %s20, 256, %s22, [#allocation3]
    $region5: #{tpu_custom_call.1} parent=1 // pred_fallthru
      _
    // Predicated region
    $region6: #{tpu_custom_call.1} parent=1 // pred_check
      _
    $region7: #{tpu_custom_call.1} parent=1 // pred_check_branch
      %26 = sbr.rel (0) target = $region9
    $region8: #{tpu_custom_call.1} parent=1 // pred_region
      %s27 = sadd.s32 0, 0
      %s28 = smul.u32 2, %s27
      %30 = vsyncadd [#allocation6], 0
      %s31 = smul.addr %s28, 8
      %s32 = scalar_lea.hbm %s1, %s31
      %s34 = sshll.u32 %s32, 4
      %s35 = int_to_ptr.hbm [resolvable:$true] %s34
      %s36 = sshll.u32 [#allocation5], 4
      %s37 = int_to_ptr.vmem [resolvable:$true] %s36
      %39 = dma.hbm_to_vmem [thread:$0]  %s35, 256, %s37, [#allocation6]
    $region9: #{tpu_custom_call.1} parent=1 // pred_fallthru
      _
    // Predicated region
    $region10: #{tpu_custom_call.1} parent=1 // pred_check
      _
    $region11: #{tpu_custom_call.1} parent=1 // pred_check_branch
      %41 = sbr.rel (0) target = $region13
    $region12: #{tpu_custom_call.1} parent=1 // pred_region
      %43 = dma.done [#allocation3], 256
    $region13: #{tpu_custom_call.1} parent=1 // pred_fallthru
      _
    // Predicated region
    $region14: #{tpu_custom_call.1} parent=1 // pred_check
      _
    $region15: #{tpu_custom_call.1} parent=1 // pred_check_branch
      %45 = sbr.rel (0) target = $region17
    $region16: #{tpu_custom_call.1} parent=1 // pred_region
      %47 = dma.done [#allocation6], 256
    $region17: #{tpu_custom_call.1} parent=1 // pred_fallthru
      _
    %s48 = sadd.s32 0, 0
    %s49 = smul.u32 2, %s48
    %s50 = sadd.s32 0, 0
    %s51 = smul.u32 2, %s50
    %p52 = scmp.eq.s32.totalorder 0, 0
    // Predicated region
    $region18: #{tpu_custom_call.1} parent=1 // pred_check
      %p53 = pneg %p52
    $region19: #{tpu_custom_call.1} parent=1 // pred_check_branch
      %55 = sbr.rel (%p53) target = $region21
    $region20: #{tpu_custom_call.1} parent=1 // pred_region
      %56 = vst [vmem:[#allocation7] sm:$0xff] 0.0
    $region21: #{tpu_custom_call.1} parent=1 // pred_fallthru
      _
    %v57 = vld [vmem:[#allocation2] sm:$0xff]
    %v58 = vld [vmem:[#allocation2 + $0x8] sm:$0xff]
    %v59 = vld [vmem:[#allocation5] sm:$0xff]
    %v60 = vld [vmem:[#allocation5 + $0x8] sm:$0xff]
    %v61 = vsub.f32 %v57, %v59
    %v62 = vsub.f32 %v58, %v60
    %v63 = vmul.f32 %v61, %v61
    %v64 = vmul.f32 %v62, %v62
    %v65 = vadd.f32 %v63, %v64
    %v66 = vld [vmem:[#allocation7] sm:$0xff]
    %v67 = vadd.f32 %v66, %v65
    %68 = vst [vmem:[#allocation7] sm:$0xff] %v67
    // Predicated region
    $region22: #{tpu_custom_call.1} parent=1 // pred_check
      _
    $region23: #{tpu_custom_call.1} parent=1 // pred_check_branch
      %70 = sbr.rel (0) target = $region25
    $region24: #{tpu_custom_call.1} parent=1 // pred_region
      %72 = vsyncadd [#allocation4], 0
      %s74 = sshll.u32 [#allocation7], 4
      %s75 = int_to_ptr.vmem [resolvable:$true] %s74
      %s76 = sshll.u32 %s2, 4
      %s77 = int_to_ptr.hbm [resolvable:$true] %s76
      %79 = dma.vmem_to_hbm [thread:$0]  %s75, 128, %s77, [#allocation4]
    $region25: #{tpu_custom_call.1} parent=1 // pred_fallthru
      _
    // Predicated region
    $region26: #{tpu_custom_call.1} parent=1 // pred_check
      _
    $region27: #{tpu_custom_call.1} parent=1 // pred_check_branch
      %81 = sbr.rel (0) target = $region29
    $region28: #{tpu_custom_call.1} parent=1 // pred_region
      %83 = dma.done [#allocation4], 128
    $region29: #{tpu_custom_call.1} parent=1 // pred_fallthru
      _
    %84 = vsyncpa [#allocation3], 1
    %85 = vsyncpa [#allocation6], 1
    %86 = vsyncpa [#allocation4], 1

</llo_original>
